<compile_context>
chip_gen: v5e
topology: v5e:2x2
jax: 0.10.0
libtpu: 0.0.40
codegen_flags: <defaults>
</compile_context>

<pallas_src>
import math
import functools

import jax
import jax.numpy as jnp
from jax import lax
from jax.experimental import pallas as pl
from jax.experimental.pallas import tpu as pltpu


def _round_up(a: int, m: int) -> int:
    return ((a + m - 1) // m) * m


def _binarize_linear_kernel(x_ref, w_ref, b_ref, o_ref, acc_ref, *,
                            precision_a: int, comp: bool, quantize_input: bool):
    k = pl.program_id(2)

    @pl.when(k == 0)
    def _():
        acc_ref[...] = jnp.zeros_like(acc_ref)

    # Cast inside the kernel (rides VPU slots under the matmul).
    x = x_ref[...].astype(jnp.float32)

    if quantize_input:
        # Quantize(tensor, numBits=p, min=-1, max=1):
        #   scale = 2/(2^p - 1); q = round((x+1)/scale)*scale - 1
        scale = 2.0 / (2 ** precision_a - 1)
        inv_scale = (2 ** precision_a - 1) / 2.0
        if comp:
            x = jnp.round((x + 1.0) * inv_scale) * scale - 1.0
        else:
            # ((q) + 1) * 0.5  ==  round((x+1)*inv_scale) * (0.5*scale)
            x = jnp.round((x + 1.0) * inv_scale) * (0.5 * scale)

    w = w_ref[...].astype(jnp.float32)          # (TN, TK)

    # Contract K (axis 1 of x) against K (axis 1 of w): no transpose needed,
    # MXU consumes the weight tile weight-stationary.
    acc_ref[...] += lax.dot_general(
        x, w,
        dimension_numbers=(((1,), (1,)), ((), ())),
        preferred_element_type=jnp.float32,
    )

    @pl.when(k == pl.num_programs(2) - 1)
    def _():
        out = acc_ref[...] + b_ref[...].astype(jnp.float32)   # bias add in f32
        o_ref[...] = out.astype(o_ref.dtype)


def binarize_linear_inference(x, weight, bias=None, *, precision_a: int = 1,
                              comp: bool = False,
                              tm: int = 128, tn: int = 256, tk: int = 512):
    """Pallas implementation of BinarizeLinear_inference.forward.

    x:      (batch, in_features)
    weight: (out_features, in_features)
    bias:   (out_features,) or None
    """
    B, K = x.shape
    N, K2 = weight.shape
    assert K == K2, f"in_features mismatch: {K} vs {K2}"
    quantize_input = (K != 784)

    out_dtype = jnp.promote_types(x.dtype, weight.dtype)

    # Adaptive tile sizes: full MXU-friendly tiles for large shapes, shrink to
    # padded-to-(8,128) blocks for tiny shapes so VMEM isn't wasted.
    TM = min(tm, _round_up(B, 8))
    TN = min(tn, _round_up(N, 128))   # output lane dim stays a multiple of 128
    TK = min(tk, _round_up(K, 128))

    Bp, Np, Kp = _round_up(B, TM), _round_up(N, TN), _round_up(K, TK)

    # Zero-pad to tile multiples (padded K columns have zero weights, so the
    # quantized padding contributes nothing; padded rows/cols sliced off below).
    xp = jnp.pad(x, ((0, Bp - B), (0, Kp - K))) if (Bp != B or Kp != K) else x
    wp = (jnp.pad(weight, ((0, Np - N), (0, Kp - K)))
          if (Np != N or Kp != K) else weight)
    if bias is None:
        bp = jnp.zeros((1, Np), dtype=out_dtype)
    else:
        b2 = bias.reshape(1, N)
        bp = jnp.pad(b2, ((0, 0), (0, Np - N))) if Np != N else b2

    grid = (Bp // TM, Np // TN, Kp // TK)

    kernel = functools.partial(
        _binarize_linear_kernel,
        precision_a=precision_a, comp=comp, quantize_input=quantize_input)

    itemsize = lambda a: jnp.dtype(a.dtype).itemsize
    cost = pl.CostEstimate(
        flops=2 * Bp * Np * Kp,
        transcendentals=0,
        bytes_accessed=(xp.size * itemsize(xp) + wp.size * itemsize(wp)
                        + bp.size * itemsize(bp)
                        + Bp * Np * jnp.dtype(out_dtype).itemsize),
    )

    out = pl.pallas_call(
        kernel,
        out_shape=jax.ShapeDtypeStruct((Bp, Np), out_dtype),
        grid_spec=pltpu.PrefetchScalarGridSpec(
            num_scalar_prefetch=0,
            grid=grid,
            in_specs=[
                pl.BlockSpec((TM, TK), lambda i, j, k: (i, k)),   # x tile
                pl.BlockSpec((TN, TK), lambda i, j, k: (j, k)),   # weight tile
                pl.BlockSpec((1, TN), lambda i, j, k: (0, j)),    # bias tile
            ],
            out_specs=pl.BlockSpec((TM, TN), lambda i, j, k: (i, j)),
            scratch_shapes=[pltpu.VMEM((TM, TN), jnp.float32)],
        ),
        compiler_params=pltpu.CompilerParams(
            dimension_semantics=("parallel", "parallel", "arbitrary")),
        cost_estimate=cost,
    )(xp, wp, bp)

    if (Bp, Np) != (B, N):
        out = out[:B, :N]
    return out


def init_params(key, in_features, out_features):
    """Deterministic init mirroring kaiming_uniform_(a=sqrt(5)) + bias init."""
    kw, kb = jax.random.split(key)
    fan_in = in_features
    w_bound = math.sqrt(6.0 / ((1.0 + 5.0) * fan_in))   # == 1/sqrt(fan_in)
    weight = jax.random.uniform(kw, (out_features, in_features),
                                minval=-w_bound, maxval=w_bound,
                                dtype=jnp.float32)
    b_bound = 1.0 / math.sqrt(fan_in)
    bias = jax.random.uniform(kb, (out_features,),
                              minval=-b_bound, maxval=b_bound,
                              dtype=jnp.float32)
    return weight, bias


def reference_forward(x, weight, bias, *, precision_a=1, comp=False):
    """Pure-JAX reference matching the PyTorch module (no clamp, as in the spec)."""
    if x.shape[1] != 784:
        scale = 2.0 / (2 ** precision_a - 1)
        xq = jnp.round((x + 1.0) / scale) * scale - 1.0
        if not comp:
            xq = (xq + 1.0) * 0.5
        x = xq
    out = x @ weight.T
    if bias is not None:
        out = out + bias[None, :]
    return out


if __name__ == "__main__":
    key = jax.random.PRNGKey(0)
    k_x, k_p = jax.random.split(key)

    batch = 8
    in_features = 32
    out_features = 16
    precision_a = 1
    comp = False

    x = jax.random.normal(k_x, (batch, in_features), dtype=jnp.float32)
    weight, bias = init_params(k_p, in_features, out_features)

    out = binarize_linear_inference(x, weight, bias,
                                    precision_a=precision_a, comp=comp)
    out = jax.block_until_ready(out)

    ref = reference_forward(x, weight, bias, precision_a=precision_a, comp=comp)
    assert out.shape == (batch, out_features), out.shape
    max_err = jnp.max(jnp.abs(out - ref))
    assert jnp.allclose(out, ref, atol=1e-5, rtol=1e-5), f"max abs err {max_err}"

    # Also exercise the comp=True branch once.
    out_c = jax.block_until_ready(
        binarize_linear_inference(x, weight, bias,
                                  precision_a=precision_a, comp=True))
    ref_c = reference_forward(x, weight, bias, precision_a=precision_a, comp=True)
    assert jnp.allclose(out_c, ref_c, atol=1e-5, rtol=1e-5)

    print("KERNEL_OK")
</pallas_src>

<mosaic_0001>
module attributes {stable_mosaic.version = 11 : i64} {
  func.func @_binarize_linear_kernel(%arg0: i32, %arg1: i32, %arg2: i32, %arg3: memref<8x128xf32, #tpu.memory_space<vmem>>, %arg4: memref<128x128xf32, #tpu.memory_space<vmem>>, %arg5: memref<1x128xf32, #tpu.memory_space<vmem>>, %arg6: memref<8x128xf32, #tpu.memory_space<vmem>>, %arg7: memref<8x128xf32, #tpu.memory_space<vmem>>) attributes {dimension_semantics = [#tpu.dimension_semantics<parallel>, #tpu.dimension_semantics<parallel>, #tpu.dimension_semantics<arbitrary>], iteration_bounds = array<i64: 1, 1, 1>, scalar_prefetch = 0 : i64, scratch_operands = 1 : i64, tpu.core_type = #tpu.core_type<tc>, window_params = [{transform_indices = @transform_0, window_bounds = array<i64: 8, 128>}, {transform_indices = @transform_1, window_bounds = array<i64: 128, 128>}, {transform_indices = @transform_2, window_bounds = array<i64: 1, 128>}, {transform_indices = @transform_3, window_bounds = array<i64: 8, 128>}]} {
    %c0_i32 = arith.constant 0 : i32
    %0 = arith.cmpi eq, %arg2, %c0_i32 : i32
    %1 = arith.extui %0 : i1 to i32
    %c0_i32_0 = arith.constant 0 : i32
    %2 = arith.cmpi ne, %1, %c0_i32_0 : i32
    scf.if %2 {
      %cst_13 = arith.constant 0.000000e+00 : f32
      %19 = vector.broadcast %cst_13 : f32 to vector<8x128xf32>
      %c0_14 = arith.constant 0 : index
      %c0_15 = arith.constant 0 : index
      %20 = vector.load %arg7[%c0_14, %c0_15] : memref<8x128xf32, #tpu.memory_space<vmem>>, vector<8x128xf32>
      tpu.vector_store %arg7[%c0_14, %c0_15], %19 {strides = array<i32>} : memref<8x128xf32, #tpu.memory_space<vmem>>, vector<8x128xf32>,
    } else {
    }
    %c0 = arith.constant 0 : index
    %c0_1 = arith.constant 0 : index
    %3 = vector.load %arg3[%c0, %c0_1] : memref<8x128xf32, #tpu.memory_space<vmem>>, vector<8x128xf32>
    %cst = arith.constant 1.000000e+00 : f32
    %4 = vector.broadcast %cst : f32 to vector<8x128xf32>
    %5 = arith.addf %3, %4 : vector<8x128xf32>
    %cst_2 = arith.constant 5.000000e-01 : f32
    %6 = vector.broadcast %cst_2 : f32 to vector<8x128xf32>
    %7 = arith.mulf %5, %6 : vector<8x128xf32>
    %8 = math.roundeven %7 : vector<8x128xf32>
    %cst_3 = arith.constant 1.000000e+00 : f32
    %9 = vector.broadcast %cst_3 : f32 to vector<8x128xf32>
    %10 = arith.mulf %8, %9 : vector<8x128xf32>
    %c0_4 = arith.constant 0 : index
    %c0_5 = arith.constant 0 : index
    %11 = vector.load %arg4[%c0_4, %c0_5] : memref<128x128xf32, #tpu.memory_space<vmem>>, vector<128x128xf32>
    %c0_6 = arith.constant 0 : index
    %c0_7 = arith.constant 0 : index
    %12 = vector.load %arg7[%c0_6, %c0_7] : memref<8x128xf32, #tpu.memory_space<vmem>>, vector<8x128xf32>
    %cst_8 = arith.constant dense<0.000000e+00> : vector<8x128xf32>
    %13 = tpu.matmul %10, %11, %cst_8 {dimension_numbers = #tpu.dot_dimension_numbers<[1], [1], [0], [0], [0, 0, 1, 0], [], []>} : vector<8x128xf32>, vector<128x128xf32>, vector<8x128xf32> -> vector<8x128xf32>
    %14 = arith.addf %12, %13 : vector<8x128xf32>
    %c0_9 = arith.constant 0 : index
    %c0_10 = arith.constant 0 : index
    %15 = vector.load %arg7[%c0_9, %c0_10] : memref<8x128xf32, #tpu.memory_space<vmem>>, vector<8x128xf32>
    tpu.vector_store %arg7[%c0_9, %c0_10], %14 {strides = array<i32>} : memref<8x128xf32, #tpu.memory_space<vmem>>, vector<8x128xf32>,
    %c0_i32_11 = arith.constant 0 : i32
    %16 = arith.cmpi eq, %arg2, %c0_i32_11 : i32
    %17 = arith.extui %16 : i1 to i32
    %c0_i32_12 = arith.constant 0 : i32
    %18 = arith.cmpi ne, %17, %c0_i32_12 : i32
    scf.if %18 {
      %c0_13 = arith.constant 0 : index
      %c0_14 = arith.constant 0 : index
      %19 = vector.load %arg7[%c0_13, %c0_14] : memref<8x128xf32, #tpu.memory_space<vmem>>, vector<8x128xf32>
      %c0_15 = arith.constant 0 : index
      %c0_16 = arith.constant 0 : index
      %20 = vector.load %arg5[%c0_15, %c0_16] : memref<1x128xf32, #tpu.memory_space<vmem>>, vector<1x128xf32>
      %21 = vector.broadcast %20 : vector<1x128xf32> to vector<8x128xf32>
      %22 = arith.addf %19, %21 : vector<8x128xf32>
      %c0_17 = arith.constant 0 : index
      %c0_18 = arith.constant 0 : index
      %23 = vector.load %arg6[%c0_17, %c0_18] : memref<8x128xf32, #tpu.memory_space<vmem>>, vector<8x128xf32>
      tpu.vector_store %arg6[%c0_17, %c0_18], %22 {strides = array<i32>} : memref<8x128xf32, #tpu.memory_space<vmem>>, vector<8x128xf32>,
    } else {
    }
    return
  }
  func.func @transform_0(%arg0: i32, %arg1: i32, %arg2: i32) -> (i32, i32) {
    %c0_i32 = arith.constant 0 : i32
    return %arg0, %arg2 : i32, i32
  }
  func.func @transform_1(%arg0: i32, %arg1: i32, %arg2: i32) -> (i32, i32) {
    %c0_i32 = arith.constant 0 : i32
    return %arg1, %arg2 : i32, i32
  }
  func.func @transform_2(%arg0: i32, %arg1: i32, %arg2: i32) -> (i32, i32) {
    %c0_i32 = arith.constant 0 : i32
    %c0_i32_0 = arith.constant 0 : i32
    return %c0_i32, %arg1 : i32, i32
  }
  func.func @transform_3(%arg0: i32, %arg1: i32, %arg2: i32) -> (i32, i32) {
    %c0_i32 = arith.constant 0 : i32
    return %arg0, %arg1 : i32, i32
  }
}

</mosaic_0001>

<llo_original>
// kernel: tpu_custom_call.1
$region0: #{tpu_custom_call.1}
  #allocation0 [shape = 'u32[]', space=smem, size = 0x4, offset = 0x4, fixed_abs, tag = 'smem constant byte address 0x4 - core index']
  #allocation1 [shape = 'u32[72,128]{1,0:T(1,128)}', space=vmem, size = 0x9000, scoped, tag = 'internal scratch']
  #allocation2 [shape = 'f32[8,128]{1,0:T(8,128)}', space=vmem, size = 0x1000, scoped, tag = 'scratch operand']
  %s0 = inlined_call_operand.hbm [shape: f32[8,128], index: 0, kind: input, shape index: {}]
  %s1 = inlined_call_operand.hbm [shape: f32[128,128], index: 1, kind: input, shape index: {}]
  %s2 = inlined_call_operand.vmem [shape: f32[1,128], index: 2, kind: input, shape index: {}]
  %s3 = inlined_call_operand.hbm [shape: f32[8,128], index: 3, kind: output, shape index: {}]
  %s4 = sld [smem:[#allocation0]]
  $region38: #{tpu_custom_call.1} parent=0
    _
  %s6 = ssub.s32 1, %s4
  %s7 = scalar_select 0, %s6, %s4
  $region1: #{tpu_custom_call.1} parent=0
    #allocation3 [shape = 'u8[4096]{0}', space=vmem, size = 0x1000, scoped, tag = 'input window, operand 0, single buffered']
    #allocation4 [shape = 's32[1]{0}', space=sflag, size = 0x4, scoped, tag = 'scoped memory for tpu_custom_call.1']
    #allocation5 [shape = 's32[1]{0}', space=sflag, size = 0x4, scoped, tag = 'scoped memory for tpu_custom_call.1']
    #allocation6 [shape = 'u8[65536]{0}', space=vmem, size = 0x10000, scoped, tag = 'input window, operand 1, single buffered']
    #allocation7 [shape = 's32[1]{0}', space=sflag, size = 0x4, scoped, tag = 'scoped memory for tpu_custom_call.1']
    #allocation8 [shape = 'u8[4096]{0}', space=vmem, size = 0x1000, scoped, tag = 'output window, operand 0, single buffered']
    %8 = vsyncpa [#allocation4], 0
    %9 = vsyncpa [#allocation7], 0
    %10 = vsyncpa [#allocation5], 0
    // Predicated region
    $region2: #{tpu_custom_call.1} parent=1 // pred_check
      _
    $region3: #{tpu_custom_call.1} parent=1 // pred_check_branch
      %12 = sbr.rel (0) target = $region5
    $region4: #{tpu_custom_call.1} parent=1 // pred_region
      %14 = vsyncadd [#allocation4], 0
      %s16 = sshll.u32 %s0, 4
      %s17 = int_to_ptr.hbm [resolvable:$true] %s16
      %s18 = sshll.u32 [#allocation3], 4
      %s19 = int_to_ptr.vmem [resolvable:$true] %s18
      %21 = dma.hbm_to_vmem [thread:$0]  %s17, 128, %s19, [#allocation4]
    $region5: #{tpu_custom_call.1} parent=1 // pred_fallthru
      _
    // Predicated region
    $region6: #{tpu_custom_call.1} parent=1 // pred_check
      _
    $region7: #{tpu_custom_call.1} parent=1 // pred_check_branch
      %23 = sbr.rel (0) target = $region9
    $region8: #{tpu_custom_call.1} parent=1 // pred_region
      %25 = vsyncadd [#allocation7], 0
      %s26 = sshll.u32 %s1, 4
      %s27 = int_to_ptr.hbm [resolvable:$true] %s26
      %s28 = sshll.u32 [#allocation6], 4
      %s29 = int_to_ptr.vmem [resolvable:$true] %s28
      %34 = dma.hbm_to_vmem [thread:$0]  %s27, 2048, %s29, [#allocation7], 128, 128, 8
    $region9: #{tpu_custom_call.1} parent=1 // pred_fallthru
      _
    // Predicated region
    $region10: #{tpu_custom_call.1} parent=1 // pred_check
      _
    $region11: #{tpu_custom_call.1} parent=1 // pred_check_branch
      %36 = sbr.rel (0) target = $region13
    $region12: #{tpu_custom_call.1} parent=1 // pred_region
      _
    $region13: #{tpu_custom_call.1} parent=1 // pred_fallthru
      _
    // Predicated region
    $region14: #{tpu_custom_call.1} parent=1 // pred_check
      _
    $region15: #{tpu_custom_call.1} parent=1 // pred_check_branch
      %38 = sbr.rel (0) target = $region17
    $region16: #{tpu_custom_call.1} parent=1 // pred_region
      %40 = dma.done [#allocation4], 128
    $region17: #{tpu_custom_call.1} parent=1 // pred_fallthru
      _
    // Predicated region
    $region18: #{tpu_custom_call.1} parent=1 // pred_check
      _
    $region19: #{tpu_custom_call.1} parent=1 // pred_check_branch
      %42 = sbr.rel (0) target = $region21
    $region20: #{tpu_custom_call.1} parent=1 // pred_region
      %44 = dma.done [#allocation7], 2048
    $region21: #{tpu_custom_call.1} parent=1 // pred_fallthru
      _
    %p45 = scmp.eq.s32.totalorder 0, 0
    // Predicated region
    $region22: #{tpu_custom_call.1} parent=1 // pred_check
      %p46 = pneg %p45
    $region23: #{tpu_custom_call.1} parent=1 // pred_check_branch
      %48 = sbr.rel (%p46) target = $region25
    $region24: #{tpu_custom_call.1} parent=1 // pred_region
      %49 = vst [vmem:[#allocation2] sm:$0xff] 0.0
    $region25: #{tpu_custom_call.1} parent=1 // pred_fallthru
      _
    %v50 = vld [vmem:[#allocation3] sm:$0xff]
    %v51 = vadd.f32 %v50, 1.0
    %v52 = vmul.f32 %v51, 0.5
    %v53 = vround.ne.pseudo %v52
    %v54 = vld [vmem:[#allocation6] sm:$0xff]
    %v55 = vld [vmem:[#allocation6 + $0x8] sm:$0xff]
    %v56 = vld [vmem:[#allocation6 + $0x10] sm:$0xff]
    %v57 = vld [vmem:[#allocation6 + $0x18] sm:$0xff]
    %v58 = vld [vmem:[#allocation6 + $0x20] sm:$0xff]
    %v59 = vld [vmem:[#allocation6 + $0x28] sm:$0xff]
    %v60 = vld [vmem:[#allocation6 + $0x30] sm:$0xff]
    %v61 = vld [vmem:[#allocation6 + $0x38] sm:$0xff]
    %v62 = vld [vmem:[#allocation6 + $0x40] sm:$0xff]
    %v63 = vld [vmem:[#allocation6 + $0x48] sm:$0xff]
    %v64 = vld [vmem:[#allocation6 + $0x50] sm:$0xff]
    %v65 = vld [vmem:[#allocation6 + $0x58] sm:$0xff]
    %v66 = vld [vmem:[#allocation6 + $0x60] sm:$0xff]
    %v67 = vld [vmem:[#allocation6 + $0x68] sm:$0xff]
    %v68 = vld [vmem:[#allocation6 + $0x70] sm:$0xff]
    %v69 = vld [vmem:[#allocation6 + $0x78] sm:$0xff]
    %v70 = vld [vmem:[#allocation2] sm:$0xff]
    %71 = vmatpush.xpose.msra.mxu0 %v69
    %72 = vmatpush.xpose.msra.mxu0 %v68
    %73 = vmatpush.xpose.msra.mxu0 %v67
    %74 = vmatpush.xpose.msra.mxu0 %v66
    %75 = vmatpush.xpose.msra.mxu0 %v65
    %76 = vmatpush.xpose.msra.mxu0 %v64
    %77 = vmatpush.xpose.msra.mxu0 %v63
    %78 = vmatpush.xpose.msra.mxu0 %v62
    %79 = vmatpush.xpose.msra.mxu0 %v61
    %80 = vmatpush.xpose.msra.mxu0 %v60
    %81 = vmatpush.xpose.msra.mxu0 %v59
    %82 = vmatpush.xpose.msra.mxu0 %v58
    %83 = vmatpush.xpose.msra.mxu0 %v57
    %84 = vmatpush.xpose.msra.mxu0 %v56
    %85 = vmatpush.xpose.msra.mxu0 %v55
    %86 = vmatpush.xpose.msra.mxu0 %v54
    %87 = vmatmul.f32.gmra.mxu0 %v53
    %v88 = vpop.f32.mrf.mxu0
    %v89 = vadd.f32 0.0, %v88
    %90 = vdwg.mxu0
    %v91 = vadd.f32 %v70, %v89
    %92 = vst [vmem:[#allocation2] sm:$0xff] %v91
    // Predicated region
    $region26: #{tpu_custom_call.1} parent=1 // pred_check
      %p93 = pneg %p45
    $region27: #{tpu_custom_call.1} parent=1 // pred_check_branch
      %95 = sbr.rel (%p93) target = $region29
    $region28: #{tpu_custom_call.1} parent=1 // pred_region
      %v96 = vld [vmem:[#allocation2] sm:$0xff]
      %v97 = vld [vmem:[%s2] sm:$0x1]
      %v99 = vperm.slane %v97, 0
      %v101 = vadd.f32 %v96, %v99
      %102 = vst [vmem:[#allocation8] sm:$0xff] %v101
    $region29: #{tpu_custom_call.1} parent=1 // pred_fallthru
      _
    // Predicated region
    $region30: #{tpu_custom_call.1} parent=1 // pred_check
      _
    $region31: #{tpu_custom_call.1} parent=1 // pred_check_branch
      %104 = sbr.rel (0) target = $region33
    $region32: #{tpu_custom_call.1} parent=1 // pred_region
      %106 = vsyncadd [#allocation5], 0
      %s108 = sshll.u32 [#allocation8], 4
      %s109 = int_to_ptr.vmem [resolvable:$true] %s108
      %s110 = sshll.u32 %s3, 4
      %s111 = int_to_ptr.hbm [resolvable:$true] %s110
      %113 = dma.vmem_to_hbm [thread:$0]  %s109, 128, %s111, [#allocation5]
    $region33: #{tpu_custom_call.1} parent=1 // pred_fallthru
      _
    // Predicated region
    $region34: #{tpu_custom_call.1} parent=1 // pred_check
      _
    $region35: #{tpu_custom_call.1} parent=1 // pred_check_branch
      %115 = sbr.rel (0) target = $region37
    $region36: #{tpu_custom_call.1} parent=1 // pred_region
      %117 = dma.done [#allocation5], 128
    $region37: #{tpu_custom_call.1} parent=1 // pred_fallthru
      _
    %118 = vsyncpa [#allocation4], 1
    %119 = vsyncpa [#allocation7], 1
    %120 = vsyncpa [#allocation5], 1

</llo_original>
